<compile_context>
chip_gen: v7x
topology: tpu7x:2x2x1
jax: 0.10.0
libtpu: 0.0.40
codegen_flags: <defaults>
</compile_context>

<pallas_src>
import numpy as np
import jax
import jax.numpy as jnp
from jax.experimental import pallas as pl
from jax.experimental.pallas import tpu as pltpu


def _round_up(n, m):
    return ((n + m - 1) // m) * m


def _cdiv(a, b):
    return -(-a // b)


# ---------------------------------------------------------------------------
# Pallas kernel: 3-layer MLP, softplus on the two hidden layers.
# x block: (TILE_B, n_in) f32; weights pre-transposed to (n_in_i, n_out_i);
# biases (1, n_out_i) f32.  Output block: (TILE_B, n_out) f32 (narrow).
# ---------------------------------------------------------------------------
def _bnn_mlp_kernel(x_ref, w1_ref, b1_ref, w2_ref, b2_ref, w3_ref, b3_ref, o_ref):
    def softplus(z):
        # numerically stable softplus (matches nn.Softplus(beta=1)); stays f32.
        return jnp.maximum(z, 0.0) + jnp.log1p(jnp.exp(-jnp.abs(z)))

    # In-kernel cast: x arrives f32 from HBM; MXU inputs take the weights' dtype.
    # The cast is a VPU op hidden under the DMA (free vs. a separate XLA pass).
    x = x_ref[...].astype(w1_ref.dtype)
    h = jnp.dot(x, w1_ref[...], preferred_element_type=jnp.float32) + b1_ref[...]
    h = softplus(h)
    h = jnp.dot(h.astype(w2_ref.dtype), w2_ref[...],
                preferred_element_type=jnp.float32) + b2_ref[...]
    h = softplus(h)
    out = jnp.dot(h.astype(w3_ref.dtype), w3_ref[...],
                  preferred_element_type=jnp.float32) + b3_ref[...]
    o_ref[...] = out.astype(o_ref.dtype)


# ---------------------------------------------------------------------------
# Wrapper: batch grid + VMEM-resident weights + narrow (unpadded) output.
# ---------------------------------------------------------------------------
def bnn_forward_pallas(x, weights_t, biases, *, compute_dtype=jnp.bfloat16,
                       tile_b=4096):
    """x: (B, n_in) float32.  weights_t[i]: (n_in_i, n_out_i) (PRE-transposed,
    done once at param setup, not per forward).  biases[i]: (n_out_i,)."""
    assert len(weights_t) == 3 and len(biases) == 3
    B, n_in = x.shape
    h1 = weights_t[0].shape[1]
    h2 = weights_t[1].shape[1]
    n_out = weights_t[2].shape[1]

    # --- batch tiling --------------------------------------------------------
    # n_steps: enough steps to respect tile_b; >=2 once there is real work so
    # the "parallel" batch axis shards across both v7x TensorCores.
    n_steps = max(1, _cdiv(B, tile_b))
    if B >= 512:
        n_steps = max(n_steps, 2)
    # tile ~ cdiv(B, n_steps) rounded to 16 -> padding stays under one tile
    # (no near-2x blowup for B slightly above tile_b).
    tile = _round_up(_cdiv(B, n_steps), 16)
    b_pad = _round_up(B, tile)

    x_p = x.astype(jnp.float32)            # no-op for f32 inputs; cast happens in-kernel
    if b_pad != B:
        x_p = jnp.pad(x_p, ((0, b_pad - B), (0, 0)))

    # --- dtypes: bf16 (or f32) MXU weights, f32 bias/softplus/accumulation ---
    w1 = weights_t[0].astype(compute_dtype)
    w2 = weights_t[1].astype(compute_dtype)
    w3 = weights_t[2].astype(compute_dtype)
    b1 = jnp.asarray(biases[0], jnp.float32).reshape(1, -1)
    b2 = jnp.asarray(biases[1], jnp.float32).reshape(1, -1)
    b3 = jnp.asarray(biases[2], jnp.float32).reshape(1, -1)

    grid = (b_pad // tile,)

    # Constant index_map => weights/biases stay VMEM-resident across grid steps.
    # (They are double-buffered by default; at a few KiB that's negligible.)
    const = lambda shape: pl.BlockSpec(shape, lambda i: (0, 0))
    in_specs = [
        pl.BlockSpec((tile, n_in), lambda i: (i, 0)),   # x: tiled over batch
        const((n_in, h1)), const((1, h1)),
        const((h1, h2)), const((1, h2)),
        const((h2, n_out)), const((1, n_out)),
    ]
    # Narrow output block: last dim equals the full array dim (legal), so the
    # HBM side of the writeback is fully contiguous and 16x smaller than the
    # previous 128-wide padded layout.
    out_specs = pl.BlockSpec((tile, n_out), lambda i: (i, 0))

    w_itemsize = jnp.dtype(compute_dtype).itemsize
    cost = pl.CostEstimate(
        flops=2 * b_pad * (n_in * h1 + h1 * h2 + h2 * n_out),
        transcendentals=2 * b_pad * (h1 + h2),
        bytes_accessed=(b_pad * n_in * 4                       # x (f32 in)
                        + b_pad * n_out * 4                    # out (f32, narrow)
                        + (w1.size + w2.size + w3.size) * w_itemsize
                        + (b1.size + b2.size + b3.size) * 4),
    )

    out = pl.pallas_call(
        _bnn_mlp_kernel,
        out_shape=jax.ShapeDtypeStruct((b_pad, n_out), jnp.float32),
        grid=grid,
        in_specs=in_specs,
        out_specs=out_specs,
        compiler_params=pltpu.CompilerParams(
            dimension_semantics=("parallel",)),
        cost_estimate=cost,
    )(x_p, w1, b1, w2, b2, w3, b3)

    return out if b_pad == B else out[:B]


# ---------------------------------------------------------------------------
# Parameter init (mirrors BNN.reset_parameters) + weight sampling (glue).
# ---------------------------------------------------------------------------
def init_bnn_params(key, n_in, n_out, n_hid_layers=2, n_hidden=32, logsig0=-3.0):
    layers_dim = [n_in] + n_hid_layers * [n_hidden] + [n_out]
    weight_mus, bias_mus, weight_logsigs, bias_logsigs = [], [], [], []
    for fin, fout in zip(layers_dim[:-1], layers_dim[1:]):
        key, k1, k2, k3, k4 = jax.random.split(key, 5)
        bound_w = float(np.sqrt(6.0 / (fin + fout)))          # xavier_uniform_
        weight_mus.append(jax.random.uniform(k1, (fout, fin), jnp.float32, -bound_w, bound_w))
        bound_b = 1.0 / float(np.sqrt(fin))
        bias_mus.append(jax.random.uniform(k2, (fout,), jnp.float32, -bound_b, bound_b))
        weight_logsigs.append(
            jax.random.uniform(k3, (fout, fin), jnp.float32, logsig0 - 1.0, logsig0 + 1.0))
        bias_logsigs.append(
            jax.random.uniform(k4, (fout,), jnp.float32, logsig0 - 1.0, logsig0 + 1.0))
    return weight_mus, bias_mus, weight_logsigs, bias_logsigs


def sample_weights(key, weight_mus, bias_mus, weight_logsigs, bias_logsigs):
    """__sample_weights with mean=False: W = mu + randn * exp(logsig).
    Returns PyTorch-layout weights (n_out, n_in)."""
    weights, biases = [], []
    for wm, bm, wl, bl in zip(weight_mus, bias_mus, weight_logsigs, bias_logsigs):
        key, kw, kb = jax.random.split(key, 3)
        weights.append(wm + jax.random.normal(kw, wm.shape, wm.dtype) * jnp.exp(wl))
        biases.append(bm + jax.random.normal(kb, bm.shape, bm.dtype) * jnp.exp(bl))
    return weights, biases


# ---------------------------------------------------------------------------
# Reference (pure JAX, PyTorch layout) for sanity check
# ---------------------------------------------------------------------------
def bnn_forward_ref(x, weights, biases):
    h = x
    n_layers = len(weights)
    for i, (w, b) in enumerate(zip(weights, biases)):
        h = h @ w.T + b
        if i < n_layers - 1:
            h = jax.nn.softplus(h)
    return h


if __name__ == "__main__":
    # small shapes consistent with the module: MLP on (batch, features)
    B, N_IN, N_HIDDEN, N_OUT = 8, 16, 32, 8

    key = jax.random.PRNGKey(0)
    k_params, k_sample, k_x = jax.random.split(key, 3)

    wm, bm, wl, bl = init_bnn_params(k_params, N_IN, N_OUT, n_hid_layers=2, n_hidden=N_HIDDEN)
    weights, biases = sample_weights(k_sample, wm, bm, wl, bl)

    # One-time layout prep (NOT per-forward): (n_out, n_in) -> (n_in, n_out).
    weights_t = [w.T for w in weights]

    x = jax.random.normal(k_x, (B, N_IN), jnp.float32)
    ref = bnn_forward_ref(x, weights, biases)

    # f32 path: bit-for-bit-ish against the reference.
    out_f32 = jax.block_until_ready(
        bnn_forward_pallas(x, weights_t, biases, compute_dtype=jnp.float32))
    np.testing.assert_allclose(np.asarray(out_f32), np.asarray(ref), rtol=1e-5, atol=1e-5)

    # bf16-MXU path (recommended on v6e/v7x): f32 accumulation, looser tolerance.
    out_bf16 = jax.block_until_ready(
        bnn_forward_pallas(x, weights_t, biases, compute_dtype=jnp.bfloat16))
    np.testing.assert_allclose(np.asarray(out_bf16), np.asarray(ref), rtol=5e-2, atol=5e-2)

    # TODO(synk): dropout (rate=0.0) and LayerNorm (disabled by default) are
    # identities in the default BNN config and are not emitted.
    # TODO(synk): for Monte-Carlo use (S weight samples), don't call this S
    # times: add a sample grid axis whose weight index_maps select the sample
    # (weights stay VMEM-resident per sample), or fuse the sampling in-kernel
    # with pltpu.prng_seed / pltpu.prng_random_bits.
    print("KERNEL_OK")
</pallas_src>

<mosaic_0001>
module attributes {stable_mosaic.version = 11 : i64} {
  func.func @_bnn_mlp_kernel(%arg0: i32, %arg1: memref<16x16xf32, #tpu.memory_space<vmem>>, %arg2: memref<16x32xf32, #tpu.memory_space<vmem>>, %arg3: memref<1x32xf32, #tpu.memory_space<vmem>>, %arg4: memref<32x32xf32, #tpu.memory_space<vmem>>, %arg5: memref<1x32xf32, #tpu.memory_space<vmem>>, %arg6: memref<32x8xf32, #tpu.memory_space<vmem>>, %arg7: memref<1x8xf32, #tpu.memory_space<vmem>>, %arg8: memref<16x8xf32, #tpu.memory_space<vmem>>) attributes {dimension_semantics = [#tpu.dimension_semantics<parallel>], iteration_bounds = array<i64: 1>, scalar_prefetch = 0 : i64, scratch_operands = 0 : i64, tpu.core_type = #tpu.core_type<tc>, window_params = [{transform_indices = @transform_0, window_bounds = array<i64: 16, 16>}, {pipeline_mode = #tpu.pipeline_mode<synchronous>, transform_indices = @transform_1, window_bounds = array<i64: 16, 32>}, {pipeline_mode = #tpu.pipeline_mode<synchronous>, transform_indices = @transform_2, window_bounds = array<i64: 1, 32>}, {pipeline_mode = #tpu.pipeline_mode<synchronous>, transform_indices = @transform_3, window_bounds = array<i64: 32, 32>}, {pipeline_mode = #tpu.pipeline_mode<synchronous>, transform_indices = @transform_4, window_bounds = array<i64: 1, 32>}, {pipeline_mode = #tpu.pipeline_mode<synchronous>, transform_indices = @transform_5, window_bounds = array<i64: 32, 8>}, {pipeline_mode = #tpu.pipeline_mode<synchronous>, transform_indices = @transform_6, window_bounds = array<i64: 1, 8>}, {transform_indices = @transform_7, window_bounds = array<i64: 16, 8>}]} {
    %c0 = arith.constant 0 : index
    %c0_0 = arith.constant 0 : index
    %0 = vector.load %arg1[%c0, %c0_0] : memref<16x16xf32, #tpu.memory_space<vmem>>, vector<16x16xf32>
    %c0_1 = arith.constant 0 : index
    %c0_2 = arith.constant 0 : index
    %1 = vector.load %arg2[%c0_1, %c0_2] : memref<16x32xf32, #tpu.memory_space<vmem>>, vector<16x32xf32>
    %cst = arith.constant dense<0.000000e+00> : vector<16x32xf32>
    %2 = tpu.matmul %0, %1, %cst {dimension_numbers = #tpu.dot_dimension_numbers<[1], [0], [0], [1], [0, 0, 1, 1], [], []>} : vector<16x16xf32>, vector<16x32xf32>, vector<16x32xf32> -> vector<16x32xf32>
    %c0_3 = arith.constant 0 : index
    %c0_4 = arith.constant 0 : index
    %3 = vector.load %arg3[%c0_3, %c0_4] : memref<1x32xf32, #tpu.memory_space<vmem>>, vector<1x32xf32>
    %4 = vector.broadcast %3 : vector<1x32xf32> to vector<16x32xf32>
    %5 = arith.addf %2, %4 : vector<16x32xf32>
    %cst_5 = arith.constant 0.000000e+00 : f32
    %6 = vector.broadcast %cst_5 : f32 to vector<16x32xf32>
    %7 = arith.maximumf %5, %6 : vector<16x32xf32>
    %8 = math.absf %5 : vector<16x32xf32>
    %cst_6 = arith.constant 0.000000e+00 : f32
    %9 = vector.broadcast %cst_6 : f32 to vector<16x32xf32>
    %10 = arith.subf %9, %8 : vector<16x32xf32>
    %11 = math.exp %10 : vector<16x32xf32>
    %12 = math.log1p %11 : vector<16x32xf32>
    %13 = arith.addf %7, %12 : vector<16x32xf32>
    %c0_7 = arith.constant 0 : index
    %c0_8 = arith.constant 0 : index
    %14 = vector.load %arg4[%c0_7, %c0_8] : memref<32x32xf32, #tpu.memory_space<vmem>>, vector<32x32xf32>
    %cst_9 = arith.constant dense<0.000000e+00> : vector<16x32xf32>
    %15 = tpu.matmul %13, %14, %cst_9 {dimension_numbers = #tpu.dot_dimension_numbers<[1], [0], [0], [1], [0, 0, 1, 1], [], []>} : vector<16x32xf32>, vector<32x32xf32>, vector<16x32xf32> -> vector<16x32xf32>
    %c0_10 = arith.constant 0 : index
    %c0_11 = arith.constant 0 : index
    %16 = vector.load %arg5[%c0_10, %c0_11] : memref<1x32xf32, #tpu.memory_space<vmem>>, vector<1x32xf32>
    %17 = vector.broadcast %16 : vector<1x32xf32> to vector<16x32xf32>
    %18 = arith.addf %15, %17 : vector<16x32xf32>
    %cst_12 = arith.constant 0.000000e+00 : f32
    %19 = vector.broadcast %cst_12 : f32 to vector<16x32xf32>
    %20 = arith.maximumf %18, %19 : vector<16x32xf32>
    %21 = math.absf %18 : vector<16x32xf32>
    %cst_13 = arith.constant 0.000000e+00 : f32
    %22 = vector.broadcast %cst_13 : f32 to vector<16x32xf32>
    %23 = arith.subf %22, %21 : vector<16x32xf32>
    %24 = math.exp %23 : vector<16x32xf32>
    %25 = math.log1p %24 : vector<16x32xf32>
    %26 = arith.addf %20, %25 : vector<16x32xf32>
    %c0_14 = arith.constant 0 : index
    %c0_15 = arith.constant 0 : index
    %27 = vector.load %arg6[%c0_14, %c0_15] : memref<32x8xf32, #tpu.memory_space<vmem>>, vector<32x8xf32>
    %cst_16 = arith.constant dense<0.000000e+00> : vector<16x8xf32>
    %28 = tpu.matmul %26, %27, %cst_16 {dimension_numbers = #tpu.dot_dimension_numbers<[1], [0], [0], [1], [0, 0, 1, 1], [], []>} : vector<16x32xf32>, vector<32x8xf32>, vector<16x8xf32> -> vector<16x8xf32>
    %c0_17 = arith.constant 0 : index
    %c0_18 = arith.constant 0 : index
    %29 = vector.load %arg7[%c0_17, %c0_18] : memref<1x8xf32, #tpu.memory_space<vmem>>, vector<1x8xf32>
    %30 = vector.broadcast %29 : vector<1x8xf32> to vector<16x8xf32>
    %31 = arith.addf %28, %30 : vector<16x8xf32>
    %c0_19 = arith.constant 0 : index
    %c0_20 = arith.constant 0 : index
    %32 = vector.load %arg8[%c0_19, %c0_20] : memref<16x8xf32, #tpu.memory_space<vmem>>, vector<16x8xf32>
    tpu.vector_store %arg8[%c0_19, %c0_20], %31 {strides = array<i32>} : memref<16x8xf32, #tpu.memory_space<vmem>>, vector<16x8xf32>,
    return
  }
  func.func @transform_0(%arg0: i32) -> (i32, i32) {
    %c0_i32 = arith.constant 0 : i32
    %c0_i32_0 = arith.constant 0 : i32
    return %arg0, %c0_i32 : i32, i32
  }
  func.func @transform_1(%arg0: i32) -> (i32, i32) {
    %c0_i32 = arith.constant 0 : i32
    %c0_i32_0 = arith.constant 0 : i32
    %c0_i32_1 = arith.constant 0 : i32
    return %c0_i32, %c0_i32_0 : i32, i32
  }
  func.func @transform_2(%arg0: i32) -> (i32, i32) {
    %c0_i32 = arith.constant 0 : i32
    %c0_i32_0 = arith.constant 0 : i32
    %c0_i32_1 = arith.constant 0 : i32
    return %c0_i32, %c0_i32_0 : i32, i32
  }
  func.func @transform_3(%arg0: i32) -> (i32, i32) {
    %c0_i32 = arith.constant 0 : i32
    %c0_i32_0 = arith.constant 0 : i32
    %c0_i32_1 = arith.constant 0 : i32
    return %c0_i32, %c0_i32_0 : i32, i32
  }
  func.func @transform_4(%arg0: i32) -> (i32, i32) {
    %c0_i32 = arith.constant 0 : i32
    %c0_i32_0 = arith.constant 0 : i32
    %c0_i32_1 = arith.constant 0 : i32
    return %c0_i32, %c0_i32_0 : i32, i32
  }
  func.func @transform_5(%arg0: i32) -> (i32, i32) {
    %c0_i32 = arith.constant 0 : i32
    %c0_i32_0 = arith.constant 0 : i32
    %c0_i32_1 = arith.constant 0 : i32
    return %c0_i32, %c0_i32_0 : i32, i32
  }
  func.func @transform_6(%arg0: i32) -> (i32, i32) {
    %c0_i32 = arith.constant 0 : i32
    %c0_i32_0 = arith.constant 0 : i32
    %c0_i32_1 = arith.constant 0 : i32
    return %c0_i32, %c0_i32_0 : i32, i32
  }
  func.func @transform_7(%arg0: i32) -> (i32, i32) {
    %c0_i32 = arith.constant 0 : i32
    %c0_i32_0 = arith.constant 0 : i32
    return %arg0, %c0_i32 : i32, i32
  }
}

</mosaic_0001>

<llo_original>
// kernel: tpu_custom_call.1
$region0: #{tpu_custom_call.1}
  #allocation0 [shape = 'u32[]', space=smem, size = 0x4, offset = 0x4, fixed_abs, tag = 'smem constant byte address 0x4 - core index']
  #allocation1 [shape = 'u32[144,128]{1,0:T(1,128)}', space=vmem, size = 0x12000, scoped, tag = 'internal scratch']
  %s0 = inlined_call_operand.vmem [shape: f32[16,16], index: 0, kind: input, shape index: {}]
  %s1 = inlined_call_operand.hbm [shape: f32[16,32], index: 1, kind: input, shape index: {}]
  %s2 = inlined_call_operand.vmem [shape: f32[1,32], index: 2, kind: input, shape index: {}]
  %s3 = inlined_call_operand.vmem [shape: f32[32,32], index: 3, kind: input, shape index: {}]
  %s4 = inlined_call_operand.vmem [shape: f32[1,32], index: 4, kind: input, shape index: {}]
  %s5 = inlined_call_operand.vmem [shape: f32[32,8], index: 5, kind: input, shape index: {}]
  %s6 = inlined_call_operand.vmem [shape: f32[1,8], index: 6, kind: input, shape index: {}]
  %s7 = inlined_call_operand.vmem [shape: f32[16,8], index: 7, kind: output, shape index: {}]
  %s8 = sld [smem:[#allocation0]]
  $region42: #{tpu_custom_call.1} parent=0
    _
  %s10 = ssub.s32 1, %s8
  %s11 = scalar_select 0, %s10, %s8
  $region1: #{tpu_custom_call.1} parent=0
    #allocation2 [shape = 'u8[8192]{0}', space=vmem, size = 0x2000, scoped, tag = 'input window, operand 1, single buffered']
    #allocation3 [shape = 's32[1]{0}', space=sflag, size = 0x4, scoped, tag = 'scoped memory for tpu_custom_call.1']
    %12 = vsyncpa [#allocation3], 0
    // Predicated region
    $region2: #{tpu_custom_call.1} parent=1 // pred_check
      _
    $region3: #{tpu_custom_call.1} parent=1 // pred_check_branch
      %14 = sbr.rel (0) target = $region5
    $region4: #{tpu_custom_call.1} parent=1 // pred_region
      _
    $region5: #{tpu_custom_call.1} parent=1 // pred_fallthru
      _
    // Predicated region
    $region6: #{tpu_custom_call.1} parent=1 // pred_check
      _
    $region7: #{tpu_custom_call.1} parent=1 // pred_check_branch
      %16 = sbr.rel (0) target = $region9
    $region8: #{tpu_custom_call.1} parent=1 // pred_region
      %s18 = ssub.s32 256, 256
      %19 = vsyncadd [#allocation3], %s18
      %s20 = sshll.u32 [#allocation2], 4
      %s21 = int_to_ptr.vmem [resolvable:$true] %s20
      %26 = dma.hbm_to_vmem [thread:$0]  %s1, 256, %s21, [#allocation3], 128, 128, 8
    $region9: #{tpu_custom_call.1} parent=1 // pred_fallthru
      _
    // Predicated region
    $region10: #{tpu_custom_call.1} parent=1 // pred_check
      _
    $region11: #{tpu_custom_call.1} parent=1 // pred_check_branch
      %28 = sbr.rel (0) target = $region13
    $region12: #{tpu_custom_call.1} parent=1 // pred_region
      _
    $region13: #{tpu_custom_call.1} parent=1 // pred_fallthru
      _
    // Predicated region
    $region14: #{tpu_custom_call.1} parent=1 // pred_check
      _
    $region15: #{tpu_custom_call.1} parent=1 // pred_check_branch
      %30 = sbr.rel (0) target = $region17
    $region16: #{tpu_custom_call.1} parent=1 // pred_region
      _
    $region17: #{tpu_custom_call.1} parent=1 // pred_fallthru
      _
    // Predicated region
    $region18: #{tpu_custom_call.1} parent=1 // pred_check
      _
    $region19: #{tpu_custom_call.1} parent=1 // pred_check_branch
      %32 = sbr.rel (0) target = $region21
    $region20: #{tpu_custom_call.1} parent=1 // pred_region
      _
    $region21: #{tpu_custom_call.1} parent=1 // pred_fallthru
      _
    // Predicated region
    $region22: #{tpu_custom_call.1} parent=1 // pred_check
      _
    $region23: #{tpu_custom_call.1} parent=1 // pred_check_branch
      %34 = sbr.rel (0) target = $region25
    $region24: #{tpu_custom_call.1} parent=1 // pred_region
      _
    $region25: #{tpu_custom_call.1} parent=1 // pred_fallthru
      _
    // Predicated region
    $region26: #{tpu_custom_call.1} parent=1 // pred_check
      _
    $region27: #{tpu_custom_call.1} parent=1 // pred_check_branch
      %36 = sbr.rel (0) target = $region29
    $region28: #{tpu_custom_call.1} parent=1 // pred_region
      _
    $region29: #{tpu_custom_call.1} parent=1 // pred_fallthru
      _
    // Predicated region
    $region30: #{tpu_custom_call.1} parent=1 // pred_check
      _
    $region31: #{tpu_custom_call.1} parent=1 // pred_check_branch
      %38 = sbr.rel (0) target = $region33
    $region32: #{tpu_custom_call.1} parent=1 // pred_region
      %39 = dma.done [#allocation3], 256
    $region33: #{tpu_custom_call.1} parent=1 // pred_fallthru
      _
    %v40 = vld [vmem:[%s0] sm:$0xff]
    %v41 = vld [vmem:[%s0 + $0x8] sm:$0xff]
    %v42 = vld [vmem:[#allocation2] sm:$0xff]
    %v43 = vld [vmem:[#allocation2 + $0x8] sm:$0xff]
    %v44 = vld [vmem:[%s2] sm:$0x1]
    %v46 = vlaneseq
    %v47 = vshrl.u32 %v46, 7
    %v48 = vsub.s32 0, %v47
    %v49 = vrot.slane %v44, %v48
    %vm51 = vcmask 130048
    %v53 = vsel %vm51, %v40, 0
    %v56 = vsel %vm51, %v41, 0
    %58 = vmatprep.subr.mxu0 0.0
    %59 = vmatpush1.msra.mxu0 %v42
    %60 = vmatprep.subr.mxu0 0.0
    %61 = vmatpush1.msra.mxu0 %v43
    %62 = vmatprep.subr.mxu0 0.0
    %63 = vmatpush1.msra.mxu0 0.0
    %64 = vmatprep.subr.mxu0 0.0
    %65 = vmatpush1.msra.mxu0 0.0
    %66 = vmatprep.subr.mxu0 0.0
    %67 = vmatpush1.msra.mxu0 0.0
    %68 = vmatprep.subr.mxu0 0.0
    %69 = vmatpush1.msra.mxu0 0.0
    %70 = vmatprep.subr.mxu0 0.0
    %71 = vmatpush1.msra.mxu0 0.0
    %72 = vmatprep.subr.mxu0 0.0
    %73 = vmatpush1.msra.mxu0 0.0
    %74 = vmatprep.subr.mxu0 0.0
    %75 = vmatpush1.msra.mxu0 0.0
    %76 = vmatprep.subr.mxu0 0.0
    %77 = vmatpush1.msra.mxu0 0.0
    %78 = vmatprep.subr.mxu0 0.0
    %79 = vmatpush1.msra.mxu0 0.0
    %80 = vmatprep.subr.mxu0 0.0
    %81 = vmatpush1.msra.mxu0 0.0
    %82 = vmatprep.subr.mxu0 0.0
    %83 = vmatpush1.msra.mxu0 0.0
    %84 = vmatprep.subr.mxu0 0.0
    %85 = vmatpush1.msra.mxu0 0.0
    %86 = vmatprep.subr.mxu0 0.0
    %87 = vmatpush1.msra.mxu0 0.0
    %88 = vmatprep.subr.mxu0 0.0
    %89 = vmatpush1.msra.mxu0 0.0
    %90 = vmatprep.subr.mxu0 0.0
    %91 = vmatpush1.msra.mxu0 0.0
    %92 = vmatprep.subr.mxu0 0.0
    %93 = vmatpush1.msra.mxu0 0.0
    %94 = vmatprep.subr.mxu0 0.0
    %95 = vmatpush1.msra.mxu0 0.0
    %96 = vmatprep.subr.mxu0 0.0
    %97 = vmatpush1.msra.mxu0 0.0
    %98 = vmatprep.subr.mxu0 0.0
    %99 = vmatpush1.msra.mxu0 0.0
    %100 = vmatprep.subr.mxu0 0.0
    %101 = vmatpush1.msra.mxu0 0.0
    %102 = vmatprep.subr.mxu0 0.0
    %103 = vmatpush1.msra.mxu0 0.0
    %104 = vmatprep.subr.mxu0 0.0
    %105 = vmatpush1.msra.mxu0 0.0
    %106 = vmatprep.subr.mxu0 0.0
    %107 = vmatpush1.msra.mxu0 0.0
    %108 = vmatprep.subr.mxu0 0.0
    %109 = vmatpush1.msra.mxu0 0.0
    %110 = vmatprep.subr.mxu0 0.0
    %111 = vmatpush1.msra.mxu0 0.0
    %112 = vmatprep.subr.mxu0 0.0
    %113 = vmatpush1.msra.mxu0 0.0
    %114 = vmatprep.subr.mxu0 0.0
    %115 = vmatpush1.msra.mxu0 0.0
    %116 = vmatprep.subr.mxu0 0.0
    %117 = vmatpush1.msra.mxu0 0.0
    %118 = vmatprep.subr.mxu0 0.0
    %119 = vmatpush1.msra.mxu0 0.0
    %120 = vmatprep.subr.mxu0 0.0
    %121 = vmatpush1.msra.mxu0 0.0
    %122 = vmatprep.mubr.f32.mxu0 0.0
    %123 = vmatmul.mubr.f32.gmra.mrb[0].mxu0 %v53
    %v124 = vpop.f32.mrb[0].mxu0
    %v125 = vadd.f32 %v49, %v124
    %v126 = vpop.f32.mrb[0].mxu0
    %127 = vmatprep.mubr.f32.mxu0 0.0
    %128 = vmatmul.mubr.f32.gmra.mrb[0].mxu0 %v56
    %v129 = vpop.f32.mrb[0].mxu0
    %v130 = vadd.f32 %v49, %v129
    %v131 = vpop.f32.mrb[0].mxu0
    %132 = vdwg.mxu0
    %v133 = vmax.f32 %v125, 0.0
    %v134 = vmax.f32 %v130, 0.0
    %v135 = vand.u32 2147483647, %v125
    %v136 = vand.u32 2147483647, %v130
    %v137 = vsub.f32 0.0, %v135
    %v138 = vsub.f32 0.0, %v136
    %v139 = vmul.f32 %v137, 1.442695
    %v140 = vpow.pop %v139
    %v141 = vmul.f32 %v138, 1.442695
    %v142 = vpow.pop %v141
    %v143 = vadd.f32 %v140, 1.0
    %v144 = vlog2.pop %v143
    %v145 = vmul.f32 %v144, 0.6931472
    %v146 = vmul.f32 -0.5, %v140
    %v147 = vadd.f32 %v146, 1.0
    %v148 = vmul.f32 %v147, %v140
    %v149 = vand.u32 2147483647, %v140
    %vm150 = vcmp.lt.f32.partialorder %v149, 0.0004427343
    %v151 = vsel %vm150, %v148, %v145
    %v152 = vadd.f32 %v142, 1.0
    %v153 = vlog2.pop %v152
    %v154 = vmul.f32 %v153, 0.6931472
    %v155 = vmul.f32 -0.5, %v142
    %v156 = vadd.f32 %v155, 1.0
    %v157 = vmul.f32 %v156, %v142
    %v158 = vand.u32 2147483647, %v142
    %vm159 = vcmp.lt.f32.partialorder %v158, 0.0004427343
    %v160 = vsel %vm159, %v157, %v154
    %v161 = vadd.f32 %v133, %v151
    %v162 = vadd.f32 %v134, %v160
    %v163 = vld [vmem:[%s3] sm:$0xff]
    %v164 = vld [vmem:[%s3 + $0x8] sm:$0xff]
    %v165 = vld [vmem:[%s3 + $0x10] sm:$0xff]
    %v166 = vld [vmem:[%s3 + $0x18] sm:$0xff]
    %v167 = vld [vmem:[%s4] sm:$0x1]
    %v169 = vlaneseq
    %v170 = vshrl.u32 %v169, 7
    %v171 = vsub.s32 0, %v170
    %v172 = vrot.slane %v167, %v171
    %vm174 = vcmask 261120
    %v176 = vsel %vm174, %v161, 0
    %v179 = vsel %vm174, %v162, 0
    %181 = vmatprep.subr.mxu0 0.0
    %182 = vmatpush1.msra.mxu0 %v163
    %183 = vmatprep.subr.mxu0 0.0
    %184 = vmatpush1.msra.mxu0 %v164
    %185 = vmatprep.subr.mxu0 0.0
    %186 = vmatpush1.msra.mxu0 %v165
    %187 = vmatprep.subr.mxu0 0.0
    %188 = vmatpush1.msra.mxu0 %v166
    %189 = vmatprep.subr.mxu0 0.0
    %190 = vmatpush1.msra.mxu0 0.0
    %191 = vmatprep.subr.mxu0 0.0
    %192 = vmatpush1.msra.mxu0 0.0
    %193 = vmatprep.subr.mxu0 0.0
    %194 = vmatpush1.msra.mxu0 0.0
    %195 = vmatprep.subr.mxu0 0.0
    %196 = vmatpush1.msra.mxu0 0.0
    %197 = vmatprep.subr.mxu0 0.0
    %198 = vmatpush1.msra.mxu0 0.0
    %199 = vmatprep.subr.mxu0 0.0
    %200 = vmatpush1.msra.mxu0 0.0
    %201 = vmatprep.subr.mxu0 0.0
    %202 = vmatpush1.msra.mxu0 0.0
    %203 = vmatprep.subr.mxu0 0.0
    %204 = vmatpush1.msra.mxu0 0.0
    %205 = vmatprep.subr.mxu0 0.0
    %206 = vmatpush1.msra.mxu0 0.0
    %207 = vmatprep.subr.mxu0 0.0
    %208 = vmatpush1.msra.mxu0 0.0
    %209 = vmatprep.subr.mxu0 0.0
    %210 = vmatpush1.msra.mxu0 0.0
    %211 = vmatprep.subr.mxu0 0.0
    %212 = vmatpush1.msra.mxu0 0.0
    %213 = vmatprep.subr.mxu0 0.0
    %214 = vmatpush1.msra.mxu0 0.0
    %215 = vmatprep.subr.mxu0 0.0
    %216 = vmatpush1.msra.mxu0 0.0
    %217 = vmatprep.subr.mxu0 0.0
    %218 = vmatpush1.msra.mxu0 0.0
    %219 = vmatprep.subr.mxu0 0.0
    %220 = vmatpush1.msra.mxu0 0.0
    %221 = vmatprep.subr.mxu0 0.0
    %222 = vmatpush1.msra.mxu0 0.0
    %223 = vmatprep.subr.mxu0 0.0
    %224 = vmatpush1.msra.mxu0 0.0
    %225 = vmatprep.subr.mxu0 0.0
    %226 = vmatpush1.msra.mxu0 0.0
    %227 = vmatprep.subr.mxu0 0.0
    %228 = vmatpush1.msra.mxu0 0.0
    %229 = vmatprep.subr.mxu0 0.0
    %230 = vmatpush1.msra.mxu0 0.0
    %231 = vmatprep.subr.mxu0 0.0
    %232 = vmatpush1.msra.mxu0 0.0
    %233 = vmatprep.subr.mxu0 0.0
    %234 = vmatpush1.msra.mxu0 0.0
    %235 = vmatprep.subr.mxu0 0.0
    %236 = vmatpush1.msra.mxu0 0.0
    %237 = vmatprep.subr.mxu0 0.0
    %238 = vmatpush1.msra.mxu0 0.0
    %239 = vmatprep.subr.mxu0 0.0
    %240 = vmatpush1.msra.mxu0 0.0
    %241 = vmatprep.subr.mxu0 0.0
    %242 = vmatpush1.msra.mxu0 0.0
    %243 = vmatprep.subr.mxu0 0.0
    %244 = vmatpush1.msra.mxu0 0.0
    %245 = vmatprep.mubr.f32.mxu0 0.0
    %246 = vmatmul.mubr.f32.gmra.mrb[0].mxu0 %v176
    %v247 = vpop.f32.mrb[0].mxu0
    %v248 = vadd.f32 %v172, %v247
    %v249 = vpop.f32.mrb[0].mxu0
    %250 = vmatprep.mubr.f32.mxu0 0.0
    %251 = vmatmul.mubr.f32.gmra.mrb[0].mxu0 %v179
    %v252 = vpop.f32.mrb[0].mxu0
    %v253 = vadd.f32 %v172, %v252
    %v254 = vpop.f32.mrb[0].mxu0
    %255 = vdwg.mxu0
    %v256 = vmax.f32 %v248, 0.0
    %v257 = vmax.f32 %v253, 0.0
    %v258 = vand.u32 2147483647, %v248
    %v259 = vand.u32 2147483647, %v253
    %v260 = vsub.f32 0.0, %v258
    %v261 = vsub.f32 0.0, %v259
    %v262 = vmul.f32 %v260, 1.442695
    %v263 = vpow.pop %v262
    %v264 = vmul.f32 %v261, 1.442695
    %v265 = vpow.pop %v264
    %v266 = vadd.f32 %v263, 1.0
    %v267 = vlog2.pop %v266
    %v268 = vmul.f32 %v267, 0.6931472
    %v269 = vmul.f32 -0.5, %v263
    %v270 = vadd.f32 %v269, 1.0
    %v271 = vmul.f32 %v270, %v263
    %v272 = vand.u32 2147483647, %v263
    %vm273 = vcmp.lt.f32.partialorder %v272, 0.0004427343
    %v274 = vsel %vm273, %v271, %v268
    %v275 = vadd.f32 %v265, 1.0
    %v276 = vlog2.pop %v275
    %v277 = vmul.f32 %v276, 0.6931472
    %v278 = vmul.f32 -0.5, %v265
    %v279 = vadd.f32 %v278, 1.0
    %v280 = vmul.f32 %v279, %v265
    %v281 = vand.u32 2147483647, %v265
    %vm282 = vcmp.lt.f32.partialorder %v281, 0.0004427343
    %v283 = vsel %vm282, %v280, %v277
    %v284 = vadd.f32 %v256, %v274
    %v285 = vadd.f32 %v257, %v283
    %v286 = vld [vmem:[%s5] sm:$0xff]
    %v287 = vld [vmem:[%s5 + $0x8] sm:$0xff]
    %v288 = vld [vmem:[%s5 + $0x10] sm:$0xff]
    %v289 = vld [vmem:[%s5 + $0x18] sm:$0xff]
    %v290 = vld [vmem:[%s6] sm:$0x1]
    %v292 = vlaneseq
    %v293 = vshrl.u32 %v292, 7
    %v294 = vsub.s32 0, %v293
    %v295 = vrot.slane %v290, %v294
    %v298 = vsel %vm174, %v284, 0
    %v301 = vsel %vm174, %v285, 0
    %303 = vmatprep.subr.mxu0 0.0
    %304 = vmatpush1.msra.mxu0 %v286
    %305 = vmatprep.subr.mxu0 0.0
    %306 = vmatpush1.msra.mxu0 %v287
    %307 = vmatprep.subr.mxu0 0.0
    %308 = vmatpush1.msra.mxu0 %v288
    %309 = vmatprep.subr.mxu0 0.0
    %310 = vmatpush1.msra.mxu0 %v289
    %311 = vmatprep.subr.mxu0 0.0
    %312 = vmatpush1.msra.mxu0 0.0
    %313 = vmatprep.subr.mxu0 0.0
    %314 = vmatpush1.msra.mxu0 0.0
    %315 = vmatprep.subr.mxu0 0.0
    %316 = vmatpush1.msra.mxu0 0.0
    %317 = vmatprep.subr.mxu0 0.0
    %318 = vmatpush1.msra.mxu0 0.0
    %319 = vmatprep.subr.mxu0 0.0
    %320 = vmatpush1.msra.mxu0 0.0
    %321 = vmatprep.subr.mxu0 0.0
    %322 = vmatpush1.msra.mxu0 0.0
    %323 = vmatprep.subr.mxu0 0.0
    %324 = vmatpush1.msra.mxu0 0.0
    %325 = vmatprep.subr.mxu0 0.0
    %326 = vmatpush1.msra.mxu0 0.0
    %327 = vmatprep.subr.mxu0 0.0
    %328 = vmatpush1.msra.mxu0 0.0
    %329 = vmatprep.subr.mxu0 0.0
    %330 = vmatpush1.msra.mxu0 0.0
    %331 = vmatprep.subr.mxu0 0.0
    %332 = vmatpush1.msra.mxu0 0.0
    %333 = vmatprep.subr.mxu0 0.0
    %334 = vmatpush1.msra.mxu0 0.0
    %335 = vmatprep.subr.mxu0 0.0
    %336 = vmatpush1.msra.mxu0 0.0
    %337 = vmatprep.subr.mxu0 0.0
    %338 = vmatpush1.msra.mxu0 0.0
    %339 = vmatprep.subr.mxu0 0.0
    %340 = vmatpush1.msra.mxu0 0.0
    %341 = vmatprep.subr.mxu0 0.0
    %342 = vmatpush1.msra.mxu0 0.0
    %343 = vmatprep.subr.mxu0 0.0
    %344 = vmatpush1.msra.mxu0 0.0
    %345 = vmatprep.subr.mxu0 0.0
    %346 = vmatpush1.msra.mxu0 0.0
    %347 = vmatprep.subr.mxu0 0.0
    %348 = vmatpush1.msra.mxu0 0.0
    %349 = vmatprep.subr.mxu0 0.0
    %350 = vmatpush1.msra.mxu0 0.0
    %351 = vmatprep.subr.mxu0 0.0
    %352 = vmatpush1.msra.mxu0 0.0
    %353 = vmatprep.subr.mxu0 0.0
    %354 = vmatpush1.msra.mxu0 0.0
    %355 = vmatprep.subr.mxu0 0.0
    %356 = vmatpush1.msra.mxu0 0.0
    %357 = vmatprep.subr.mxu0 0.0
    %358 = vmatpush1.msra.mxu0 0.0
    %359 = vmatprep.subr.mxu0 0.0
    %360 = vmatpush1.msra.mxu0 0.0
    %361 = vmatprep.subr.mxu0 0.0
    %362 = vmatpush1.msra.mxu0 0.0
    %363 = vmatprep.subr.mxu0 0.0
    %364 = vmatpush1.msra.mxu0 0.0
    %365 = vmatprep.subr.mxu0 0.0
    %366 = vmatpush1.msra.mxu0 0.0
    %367 = vmatprep.mubr.f32.mxu0 0.0
    %368 = vmatmul.mubr.f32.gmra.mrb[0].mxu0 %v298
    %v369 = vpop.f32.mrb[0].mxu0
    %v370 = vadd.f32 %v295, %v369
    %v371 = vpop.f32.mrb[0].mxu0
    %372 = vmatprep.mubr.f32.mxu0 0.0
    %373 = vmatmul.mubr.f32.gmra.mrb[0].mxu0 %v301
    %v374 = vpop.f32.mrb[0].mxu0
    %v375 = vadd.f32 %v295, %v374
    %v376 = vpop.f32.mrb[0].mxu0
    %377 = vdwg.mxu0
    %vm378 = vcmask 64512
    %379 = vst.msk [vmem:[%s7] sm:$0xff] %vm378, %v370
    %380 = vst.msk [vmem:[%s7 + $0x8] sm:$0xff] %vm378, %v375
    // Predicated region
    $region34: #{tpu_custom_call.1} parent=1 // pred_check
      _
    $region35: #{tpu_custom_call.1} parent=1 // pred_check_branch
      %382 = sbr.rel (0) target = $region37
    $region36: #{tpu_custom_call.1} parent=1 // pred_region
      _
    $region37: #{tpu_custom_call.1} parent=1 // pred_fallthru
      _
    // Predicated region
    $region38: #{tpu_custom_call.1} parent=1 // pred_check
      _
    $region39: #{tpu_custom_call.1} parent=1 // pred_check_branch
      %384 = sbr.rel (0) target = $region41
    $region40: #{tpu_custom_call.1} parent=1 // pred_region
      _
    $region41: #{tpu_custom_call.1} parent=1 // pred_fallthru
      _
    %385 = vsyncpa [#allocation3], 1

</llo_original>
